<compile_context>
chip_gen: v7x
topology: tpu7x:2x2x1
jax: 0.10.0
libtpu: 0.0.40
codegen_flags: <defaults>
</compile_context>

<pallas_src>
import math

import jax
import jax.numpy as jnp
from jax.experimental import pallas as pl
from jax.experimental.pallas import tpu as pltpu


# ----------------------------------------------------------------------------
# Pallas kernel: fused SE block forward (one batch element per grid step)
# ----------------------------------------------------------------------------
def _make_se_kernel(C, D, hw_true):
    inv_hw = 1.0 / float(hw_true)

    def kernel(x_ref, p_ref, o_ref):
        # x_ref : (C, HW)        one batch element, lane-dense
        # p_ref : (C+1, 2*D+1)   packed parameters:
        #           [:C, :D]        = w_down^T   (C, D)
        #           [C,  :D]        = b_down     (1, D)
        #           [:C, D:2D]      = w_up       (C, D)
        #           [:C, 2D:2D+1]   = b_up       (C, 1)
        # o_ref : (C, HW)
        x = x_ref[...]
        xf = x.astype(jnp.float32)            # accumulate pool in f32

        # Global average pool over the lane axis.
        pooled = jnp.sum(xf, axis=1, keepdims=True) * inv_hw          # (C, 1)

        p = p_ref[...]
        wdT = p[:C, :D]                                               # (C, D)
        bd = p[C:C + 1, :D]                                           # (1, D)
        wu = p[:C, D:2 * D]                                           # (C, D)
        bu = p[:C, 2 * D:2 * D + 1]                                   # (C, 1)

        # Down 1x1 conv: broadcast-multiply + sublane reduce, bias, ReLU.
        h = jnp.maximum(jnp.sum(wdT * pooled, axis=0, keepdims=True) + bd, 0.0)

        # Up 1x1 conv: broadcast-multiply + lane reduce, bias, sigmoid.
        z = jnp.sum(wu * h, axis=1, keepdims=True) + bu               # (C, 1)
        scale = pl.reciprocal(1.0 + jnp.exp(-z), approx=True)         # EUP path

        # Channel-wise rescale; store in the I/O dtype (lane-dense).
        o_ref[...] = (xf * scale).astype(o_ref.dtype)

    return kernel


# ----------------------------------------------------------------------------
# Wrapper
# ----------------------------------------------------------------------------
def pack_params(w_down, b_down, w_up, b_up):
    """Pack SE parameters into one (C+1, 2D+1) f32 array. Call once per
    weight set (hoisted out of the forward hot path)."""
    D, C = w_down.shape
    p = jnp.zeros((C + 1, 2 * D + 1), jnp.float32)
    p = p.at[:C, :D].set(jnp.transpose(w_down).astype(jnp.float32))
    p = p.at[C, :D].set(b_down.astype(jnp.float32))
    p = p.at[:C, D:2 * D].set(w_up.astype(jnp.float32))
    p = p.at[:C, 2 * D].set(b_up.astype(jnp.float32))
    return p


def se_block_forward(x_nchw, packed_params):
    """SEBlock forward. x_nchw: (N, C, H, W); packed_params from pack_params.
    Returns (N, C, H, W) in x_nchw.dtype."""
    N, C, H, W = x_nchw.shape
    assert packed_params.shape[0] == C + 1
    D = (packed_params.shape[1] - 1) // 2
    # TODO(synk): avg_pool2d(kernel_size=W) on non-square inputs (H != W) is
    #             not a global pool; not implemented here.
    assert H == W, "SEBlock kernel assumes square spatial input"

    HW = H * W
    x3d = x_nchw.reshape(N, C, HW)            # free: contiguous reshape

    dtype_bytes = jnp.dtype(x3d.dtype).itemsize
    cost = pl.CostEstimate(
        flops=3 * N * C * HW + 4 * N * C * D,
        transcendentals=2 * N * C,
        bytes_accessed=2 * N * C * HW * dtype_bytes,
    )

    out3d = pl.pallas_call(
        _make_se_kernel(C, D, HW),
        out_shape=jax.ShapeDtypeStruct((N, C, HW), x3d.dtype),
        grid=(N,),
        in_specs=[
            pl.BlockSpec((None, C, HW), lambda n: (n, 0, 0)),        # x (per batch)
            pl.BlockSpec((C + 1, 2 * D + 1), lambda n: (0, 0)),      # packed params
        ],
        out_specs=pl.BlockSpec((None, C, HW), lambda n: (n, 0, 0)),
        compiler_params=pltpu.CompilerParams(
            dimension_semantics=("parallel",),        # shards over TCs on v7x
            vmem_limit_bytes=32 * 1024 * 1024,        # safe on v5e/v6e/v7x
        ),
        cost_estimate=cost,
    )(x3d, packed_params)

    return out3d.reshape(N, C, H, W)


# ----------------------------------------------------------------------------
# Parameters (deterministic) + plain-JAX reference for verification
# ----------------------------------------------------------------------------
def init_params(key, C, D):
    """Deterministic Conv2d-style init for down (C->D) and up (D->C) 1x1 convs."""
    k1, k2, k3, k4 = jax.random.split(key, 4)
    bound_d = 1.0 / math.sqrt(C)
    w_down = jax.random.uniform(k1, (D, C), jnp.float32, -bound_d, bound_d)
    b_down = jax.random.uniform(k2, (D,), jnp.float32, -bound_d, bound_d)
    bound_u = 1.0 / math.sqrt(D)
    w_up = jax.random.uniform(k3, (C, D), jnp.float32, -bound_u, bound_u)
    b_up = jax.random.uniform(k4, (C,), jnp.float32, -bound_u, bound_u)
    return w_down, b_down, w_up, b_up


def reference_forward(x_nchw, w_down, b_down, w_up, b_up):
    """Plain-JAX SEBlock forward (PyTorch semantics, H == W)."""
    pooled = jnp.mean(x_nchw, axis=(2, 3))                    # avg_pool2d(k=W)
    h = jnp.maximum(pooled @ w_down.T + b_down, 0.0)          # down 1x1 + relu
    z = h @ w_up.T + b_up                                     # up 1x1
    scale = 1.0 / (1.0 + jnp.exp(-z))                         # sigmoid
    return x_nchw * scale[:, :, None, None]


# ----------------------------------------------------------------------------
if __name__ == "__main__":
    N, C, H, W = 2, 4, 16, 16
    D = 2  # internal_neurons

    key = jax.random.PRNGKey(0)
    k_params, k_x = jax.random.split(key)
    w_down, b_down, w_up, b_up = init_params(k_params, C, D)
    x = jax.random.normal(k_x, (N, C, H, W), jnp.float32)

    # Hoisted parameter preprocessing: done once per weight set.
    params = jax.block_until_ready(pack_params(w_down, b_down, w_up, b_up))

    out = se_block_forward(x, params)
    out = jax.block_until_ready(out)

    ref = reference_forward(x, w_down, b_down, w_up, b_up)
    assert out.shape == (N, C, H, W)
    # Slightly loosened tolerance: sigmoid uses the approximate EUP reciprocal.
    err = float(jnp.max(jnp.abs(out - ref)))
    assert jnp.allclose(out, ref, atol=2e-3, rtol=2e-3), err

    print("KERNEL_OK")
</pallas_src>

<mosaic_0001>
module attributes {stable_mosaic.version = 11 : i64} {
  func.func @kernel(%arg0: i32, %arg1: memref<1x4x256xf32, #tpu.memory_space<vmem>>, %arg2: memref<5x5xf32, #tpu.memory_space<vmem>>, %arg3: memref<1x4x256xf32, #tpu.memory_space<vmem>>) attributes {dimension_semantics = [#tpu.dimension_semantics<parallel>], iteration_bounds = array<i64: 2>, scalar_prefetch = 0 : i64, scratch_operands = 0 : i64, tpu.core_type = #tpu.core_type<tc>, window_params = [{transform_indices = @transform_0, window_bounds = array<i64: 1, 4, 256>}, {pipeline_mode = #tpu.pipeline_mode<synchronous>, transform_indices = @transform_1, window_bounds = array<i64: 5, 5>}, {transform_indices = @transform_2, window_bounds = array<i64: 1, 4, 256>}]} {
    %c0 = arith.constant 0 : index
    %c0_0 = arith.constant 0 : index
    %c0_1 = arith.constant 0 : index
    %0 = vector.load %arg1[%c0, %c0_0, %c0_1] : memref<1x4x256xf32, #tpu.memory_space<vmem>>, vector<1x4x256xf32>
    %1 = vector.shape_cast %0 : vector<1x4x256xf32> to vector<4x256xf32>
    %cst = arith.constant dense<0.000000e+00> : vector<4xf32>
    %2 = vector.multi_reduction <add>, %1, %cst [1] : vector<4x256xf32> to vector<4xf32>
    %3 = vector.shape_cast %2 : vector<4xf32> to vector<4x1xf32>
    %cst_2 = arith.constant 3.906250e-03 : f32
    %4 = vector.broadcast %cst_2 : f32 to vector<4x1xf32>
    %5 = arith.mulf %3, %4 : vector<4x1xf32>
    %c0_3 = arith.constant 0 : index
    %c0_4 = arith.constant 0 : index
    %6 = vector.load %arg2[%c0_3, %c0_4] : memref<5x5xf32, #tpu.memory_space<vmem>>, vector<5x5xf32>
    %7 = vector.extract_strided_slice %6 {offsets = [0, 0], sizes = [4, 2], strides = [1, 1]} : vector<5x5xf32> to vector<4x2xf32>
    %8 = vector.extract_strided_slice %6 {offsets = [4, 0], sizes = [1, 2], strides = [1, 1]} : vector<5x5xf32> to vector<1x2xf32>
    %9 = vector.extract_strided_slice %6 {offsets = [0, 2], sizes = [4, 2], strides = [1, 1]} : vector<5x5xf32> to vector<4x2xf32>
    %10 = vector.extract_strided_slice %6 {offsets = [0, 4], sizes = [4, 1], strides = [1, 1]} : vector<5x5xf32> to vector<4x1xf32>
    %11 = vector.broadcast %5 : vector<4x1xf32> to vector<4x2xf32>
    %12 = arith.mulf %7, %11 : vector<4x2xf32>
    %cst_5 = arith.constant dense<0.000000e+00> : vector<2xf32>
    %13 = vector.multi_reduction <add>, %12, %cst_5 [0] : vector<4x2xf32> to vector<2xf32>
    %14 = vector.shape_cast %13 : vector<2xf32> to vector<1x2xf32>
    %15 = arith.addf %14, %8 : vector<1x2xf32>
    %cst_6 = arith.constant 0.000000e+00 : f32
    %16 = vector.broadcast %cst_6 : f32 to vector<1x2xf32>
    %17 = arith.maximumf %15, %16 : vector<1x2xf32>
    %18 = vector.broadcast %17 : vector<1x2xf32> to vector<4x2xf32>
    %19 = arith.mulf %9, %18 : vector<4x2xf32>
    %cst_7 = arith.constant dense<0.000000e+00> : vector<4xf32>
    %20 = vector.multi_reduction <add>, %19, %cst_7 [1] : vector<4x2xf32> to vector<4xf32>
    %21 = vector.shape_cast %20 : vector<4xf32> to vector<4x1xf32>
    %22 = arith.addf %21, %10 : vector<4x1xf32>
    %cst_8 = arith.constant 0.000000e+00 : f32
    %23 = vector.broadcast %cst_8 : f32 to vector<4x1xf32>
    %24 = arith.subf %23, %22 : vector<4x1xf32>
    %25 = math.exp %24 : vector<4x1xf32>
    %cst_9 = arith.constant 1.000000e+00 : f32
    %26 = vector.broadcast %cst_9 : f32 to vector<4x1xf32>
    %27 = arith.addf %26, %25 : vector<4x1xf32>
    %28 = tpu.reciprocal %27 {approx = true} : vector<4x1xf32> -> vector<4x1xf32>
    %29 = vector.broadcast %28 : vector<4x1xf32> to vector<4x256xf32>
    %30 = arith.mulf %1, %29 : vector<4x256xf32>
    %c0_10 = arith.constant 0 : index
    %c0_11 = arith.constant 0 : index
    %c0_12 = arith.constant 0 : index
    %31 = vector.load %arg3[%c0_10, %c0_11, %c0_12] : memref<1x4x256xf32, #tpu.memory_space<vmem>>, vector<1x4x256xf32>
    %32 = vector.shape_cast %31 : vector<1x4x256xf32> to vector<4x256xf32>
    %33 = vector.shape_cast %30 : vector<4x256xf32> to vector<1x4x256xf32>
    tpu.vector_store %arg3[%c0_10, %c0_11, %c0_12], %33 {strides = array<i32>} : memref<1x4x256xf32, #tpu.memory_space<vmem>>, vector<1x4x256xf32>,
    return
  }
  func.func @transform_0(%arg0: i32) -> (i32, i32, i32) {
    %c0_i32 = arith.constant 0 : i32
    %c0_i32_0 = arith.constant 0 : i32
    %c0_i32_1 = arith.constant 0 : i32
    return %arg0, %c0_i32, %c0_i32_0 : i32, i32, i32
  }
  func.func @transform_1(%arg0: i32) -> (i32, i32) {
    %c0_i32 = arith.constant 0 : i32
    %c0_i32_0 = arith.constant 0 : i32
    %c0_i32_1 = arith.constant 0 : i32
    return %c0_i32, %c0_i32_0 : i32, i32
  }
  func.func @transform_2(%arg0: i32) -> (i32, i32, i32) {
    %c0_i32 = arith.constant 0 : i32
    %c0_i32_0 = arith.constant 0 : i32
    %c0_i32_1 = arith.constant 0 : i32
    return %arg0, %c0_i32, %c0_i32_0 : i32, i32, i32
  }
}

</mosaic_0001>

<llo_original>
// kernel: tpu_custom_call.1
$region0: #{tpu_custom_call.1}
  #allocation0 [shape = 'u32[]', space=smem, size = 0x4, offset = 0x4, fixed_abs, tag = 'smem constant byte address 0x4 - core index']
  #allocation1 [shape = 'u32[144,128]{1,0:T(1,128)}', space=vmem, size = 0x12000, scoped, tag = 'internal scratch']
  %s0 = inlined_call_operand.hbm [shape: f32[2,4,256], index: 0, kind: input, shape index: {}]
  %s1 = inlined_call_operand.hbm [shape: f32[5,5], index: 1, kind: input, shape index: {}]
  %s2 = inlined_call_operand.hbm [shape: f32[2,4,256], index: 2, kind: output, shape index: {}]
  %s3 = sld [smem:[#allocation0]]
  $region49: #{tpu_custom_call.1} parent=0
    _
  %s5 = ssub.s32 1, %s3
  %s6 = scalar_select 0, %s5, %s3
  $region1: #{tpu_custom_call.1} parent=0
    #allocation2 [shape = 'u8[8192]{0}', space=vmem, size = 0x2000, scoped, tag = 'input window, operand 0']
    #allocation3 [shape = 's32[2]{0}', space=sflag, size = 0x8, scoped, tag = 'scoped memory for tpu_custom_call.1']
    #allocation4 [shape = 's32[2]{0}', space=sflag, size = 0x8, scoped, tag = 'scoped memory for tpu_custom_call.1']
    #allocation5 [shape = 'u8[4096]{0}', space=vmem, size = 0x1000, scoped, tag = 'input window, operand 1, single buffered']
    #allocation6 [shape = 's32[1]{0}', space=sflag, size = 0x4, scoped, tag = 'scoped memory for tpu_custom_call.1']
    #allocation7 [shape = 'u8[8192]{0}', space=vmem, size = 0x2000, scoped, tag = 'output window, operand 0']
    %7 = vsyncpa [#allocation3], 0
    %s8 = scalar_lea.sflag [#allocation3], 1
    %9 = vsyncpa %s8, 0
    %10 = vsyncpa [#allocation6], 0
    %11 = vsyncpa [#allocation4], 0
    %s12 = scalar_lea.sflag [#allocation4], 1
    %13 = vsyncpa %s12, 0
    loop: start=0, step=1, limit=4
    $region2: #{tpu_custom_call.1} parent=1 // loop_pre_header
      _
    $region3: #{tpu_custom_call.1} parent=1 // loop_header
      %s15 = sphi 0, %s19
      %p16 = scmp.ge.s32.totalorder %s15, 4
      %s25 = sphi 0, %s27
      %s28 = sphi 0, %s25
      %s29 = sphi 0, %s28
      %s45 = sphi 0, %s29
      %s49 = sphi 0, %s49
      %s51 = sphi 0, %s49
      %s52 = sphi 0, %s51
      %s66 = sphi 0, %s52
      %s72 = sphi 0, %s74
      %s75 = sphi 0, %s72
      %s76 = sphi 0, %s75
      %s92 = sphi 0, %s76
    $region4: #{tpu_custom_call.1} parent=1 // loop_header_branch
      %18 = sbr.rel (%p16) target = $region8
    $region5: #{tpu_custom_call.1} parent=1 // loop_body
      %s20 = ssub.s32 %s15, 1
      %s21 = ssub.s32 %s15, 2
      %s22 = sadd.s32 %s15, 1
      %s23 = ssub.s32 %s15, %s22
      %p24 = scmp.eq.s32.totalorder %s23, 0
      %s26 = sadd.s32 %s25, 1
      %s27 = scalar_select %p24, %s25, %s26
      %p30 = pneg %p24
      %p31 = scmp.eq.s32.totalorder %s15, 1
      %p32 = por %p30, %p31
      %p33 = scmp.ne.s32.totalorder %s25, %s28
      %p34 = scmp.eq.s32.totalorder %s15, 0
      %p35 = por %p33, %p34
      %p36 = scmp.ne.s32.totalorder %s25, %s28
      %p37 = scmp.eq.s32.totalorder %s20, 1
      %p38 = por %p36, %p37
      %p39 = scmp.ne.s32.totalorder %s28, %s29
      %p40 = scmp.eq.s32.totalorder %s20, 0
      %p41 = por %p39, %p40
      %p42 = scmp.ne.s32.totalorder %s28, %s29
      %p43 = scmp.eq.s32.totalorder %s21, 1
      %p44 = por %p42, %p43
      %p46 = scmp.ne.s32.totalorder %s29, %s45
      %p47 = scmp.eq.s32.totalorder %s21, 0
      %p48 = por %p46, %p47
      %s50 = sadd.s32 %s49, 1
      %p53 = scmp.eq.s32.totalorder %s15, 1
      %p54 = scmp.ne.s32.totalorder %s49, %s51
      %p55 = scmp.eq.s32.totalorder %s15, 0
      %p56 = por %p54, %p55
      %p57 = scmp.ne.s32.totalorder %s49, %s51
      %p58 = scmp.eq.s32.totalorder %s20, 1
      %p59 = por %p57, %p58
      %p60 = scmp.ne.s32.totalorder %s51, %s52
      %p61 = scmp.eq.s32.totalorder %s20, 0
      %p62 = por %p60, %p61
      %p63 = scmp.ne.s32.totalorder %s51, %s52
      %p64 = scmp.eq.s32.totalorder %s21, 1
      %p65 = por %p63, %p64
      %p67 = scmp.ne.s32.totalorder %s52, %s66
      %p68 = scmp.eq.s32.totalorder %s21, 0
      %p69 = por %p67, %p68
      %s70 = ssub.s32 %s15, %s22
      %p71 = scmp.eq.s32.totalorder %s70, 0
      %s73 = sadd.s32 %s72, 1
      %s74 = scalar_select %p71, %s72, %s73
      %p77 = pneg %p71
      %p78 = scmp.eq.s32.totalorder %s15, 1
      %p79 = por %p77, %p78
      %p80 = scmp.ne.s32.totalorder %s72, %s75
      %p81 = scmp.eq.s32.totalorder %s15, 0
      %p82 = por %p80, %p81
      %p83 = scmp.ne.s32.totalorder %s72, %s75
      %p84 = scmp.eq.s32.totalorder %s20, 1
      %p85 = por %p83, %p84
      %p86 = scmp.ne.s32.totalorder %s75, %s76
      %p87 = scmp.eq.s32.totalorder %s20, 0
      %p88 = por %p86, %p87
      %p89 = scmp.ne.s32.totalorder %s75, %s76
      %p90 = scmp.eq.s32.totalorder %s21, 1
      %p91 = por %p89, %p90
      %p93 = scmp.ne.s32.totalorder %s76, %s92
      %p94 = scmp.eq.s32.totalorder %s21, 0
      %p95 = por %p93, %p94
      %p96 = scmp.le.s32.totalorder 1, %s15
      %p97 = scmp.lt.s32.totalorder %s15, 3
      %p98 = pnand %p96, %p97
      %p99 = pneg %p98
      // Predicated region
      $region9: #{tpu_custom_call.1} parent=5 // pred_check
        _
      $region10: #{tpu_custom_call.1} parent=5 // pred_check_branch
        %101 = sbr.rel (%p98) target = $region12
      $region11: #{tpu_custom_call.1} parent=5 // pred_region
        %s102 = ssub.s32 %s15, 1
        // Predicated region
        $region13: #{tpu_custom_call.1} parent=11 // pred_check
          %p103 = pneg %p62
        $region14: #{tpu_custom_call.1} parent=11 // pred_check_branch
          %105 = sbr.rel (%p103) target = $region16
        $region15: #{tpu_custom_call.1} parent=11 // pred_region
          %s107 = ssub.s32 128, 128
          %108 = vsyncadd [#allocation6], %s107
          %s110 = sshll.u32 [#allocation5], 4
          %s111 = int_to_ptr.vmem [resolvable:$true] %s110
          %113 = dma.hbm_to_vmem [thread:$0]  %s1, 128, %s111, [#allocation6]
        $region16: #{tpu_custom_call.1} parent=11 // pred_fallthru
          _
      $region12: #{tpu_custom_call.1} parent=5 // pred_fallthru
        _
      %p114 = scmp.lt.s32.totalorder %s15, 2
      // Predicated region
      $region17: #{tpu_custom_call.1} parent=5 // pred_check
        %p115 = pneg %p114
      $region18: #{tpu_custom_call.1} parent=5 // pred_check_branch
        %117 = sbr.rel (%p115) target = $region20
      $region19: #{tpu_custom_call.1} parent=5 // pred_region
        // Predicated region
        $region21: #{tpu_custom_call.1} parent=19 // pred_check
          %p118 = pneg %p35
        $region22: #{tpu_custom_call.1} parent=19 // pred_check_branch
          %120 = sbr.rel (%p118) target = $region24
        $region23: #{tpu_custom_call.1} parent=19 // pred_region
          %s121 = sand.u32 %s25, 1
          %s122 = scalar_lea.sflag [#allocation3], %s121
          %s123 = sand.u32 %s25, 1
          %s124 = smul.addr %s123, 8
          %s125 = scalar_lea.vmem [#allocation2], %s124
          %s127 = ssub.s32 128, 128
          %128 = vsyncadd %s122, %s127
          %s129 = smul.addr %s15, 2
          %s130 = smul.addr %s129, 64
          %s131 = scalar_lea.hbm %s0, %s130
          %s133 = sshll.u32 %s125, 4
          %s134 = int_to_ptr.vmem [resolvable:$true] %s133
          %136 = dma.hbm_to_vmem [thread:$0]  %s131, 128, %s134, %s122
        $region24: #{tpu_custom_call.1} parent=19 // pred_fallthru
          _
      $region20: #{tpu_custom_call.1} parent=5 // pred_fallthru
        _
      %p137 = scmp.le.s32.totalorder 1, %s15
      %p138 = scmp.lt.s32.totalorder %s15, 3
      %p139 = pnand %p137, %p138
      %p140 = pneg %p139
      // Predicated region
      $region25: #{tpu_custom_call.1} parent=5 // pred_check
        _
      $region26: #{tpu_custom_call.1} parent=5 // pred_check_branch
        %142 = sbr.rel (%p139) target = $region28
      $region27: #{tpu_custom_call.1} parent=5 // pred_region
        %s143 = ssub.s32 %s15, 1
        %s144 = sand.u32 %s28, 1
        %s145 = scalar_lea.sflag [#allocation3], %s144
        %s146 = sand.u32 %s28, 1
        %s147 = smul.addr %s146, 8
        %s148 = scalar_lea.vmem [#allocation2], %s147
        // Predicated region
        $region29: #{tpu_custom_call.1} parent=27 // pred_check
          %p149 = pneg %p41
        $region30: #{tpu_custom_call.1} parent=27 // pred_check_branch
          %151 = sbr.rel (%p149) target = $region32
        $region31: #{tpu_custom_call.1} parent=27 // pred_region
          %152 = dma.done %s145, 128
        $region32: #{tpu_custom_call.1} parent=27 // pred_fallthru
          _
        // Predicated region
        $region33: #{tpu_custom_call.1} parent=27 // pred_check
          %p153 = pneg %p62
        $region34: #{tpu_custom_call.1} parent=27 // pred_check_branch
          %155 = sbr.rel (%p153) target = $region36
        $region35: #{tpu_custom_call.1} parent=27 // pred_region
          %156 = dma.done [#allocation6], 128
        $region36: #{tpu_custom_call.1} parent=27 // pred_fallthru
          _
        %s157 = sand.u32 %s28, 1
        %s158 = scalar_lea.sflag [#allocation3], %s157
        %s159 = sand.u32 %s28, 1
        %s160 = smul.addr %s159, 8
        %s161 = scalar_lea.vmem [#allocation2], %s160
        %p162 = pneg %p41
        %p163 = pneg %p38
        %p164 = pneg %p62
        %p165 = pneg %p59
        %p166 = pneg %p88
        %p167 = pneg %p85
        %s168 = sand.u32 %s75, 1
        %s169 = scalar_lea.sflag [#allocation4], %s168
        %s170 = sand.u32 %s75, 1
        %s171 = smul.addr %s170, 8
        %s172 = scalar_lea.vmem [#allocation7], %s171
        %v173 = vld [vmem:[%s148] sm:$0xff]
        %v175 = vcombine.high %v173, %v173
        %vm177 = vcmask 1043456
        %v178 = vsel %vm177, %v173, 0.0
        %v179 = vsel %vm177, %v175, 0.0
        %v180 = vadd.f32 %v178, %v179
        %181 = vadd.xlane.f32.xlu0 %v180
        %v182 = vpop.xlane.xlu0 %181
        %v183 = vmul.f32 %v182, 0.00390625
        %v184 = vld [vmem:[#allocation5] sm:$0x1f]
        %v185 = vmul.f32 %v184, %v183
        %vm186 = vcmask 11264
        %v187 = vsel %vm186, %v185, 0.0
        %v188 = vrot.slane %v187, 4
        %v189 = vadd.f32 %v187, %v188
        %v190 = vrot.slane %v189, 2
        %v191 = vadd.f32 %v189, %v190
        %v192 = vrot.slane %v191, 1
        %v193 = vadd.f32 %v191, %v192
        %v194 = vadd.f32 %v193, %v184
        %v195 = vmax.f32 %v194, 0.0
        %v196 = vlaneseq
        %v197 = vshrl.u32 %v196, 7
        %v198 = vsub.s32 4, %v197
        %v199 = vrot.slane %v195, %v198
        %201 = vrot.lane.b32.xlu0 %v199, 2
        %v202 = vpop.permute.xlu0 %201
        %v204 = vmul.f32 %v184, %v202
        %206 = vrot.lane.b32.xlu0 %v204, 126
        %v207 = vpop.permute.xlu0 %206
        %v209 = vsel %vm186, %v207, 0.0
        %210 = vadd.xlane.f32.xlu0 %v209
        %v211 = vpop.xlane.xlu0 %210
        %v212 = vadd.f32 %v211, %v184
        %v213 = vsub.f32 0.0, %v212
        %v214 = vmul.f32 %v213, 1.442695
        %v215 = vpow.pop %v214
        %v216 = vadd.f32 %v215, 1.0
        %v217 = vrcp.pop %v216
        %219 = vset.pattern.permute.xlu0 4
        %220 = vperm.xlu0 %219, %v217
        %v221 = vpop.permute.xlu0 %220
        %v223 = vunpack.c.l.s4 839922192
        %v224 = vunpack.c.0.s8 %v223
        %v225 = vlaneseq
        %v226 = vshrl.u32 %v225, 7
        %v227 = vsub.s32 %v224, %v226
        %v228 = vrot.slane %v221, %v227
        %v230 = vmul.f32 %v173, %v228
        %231 = vst [vmem:[%s172] sm:$0xff] %v230
        %s232 = sand.u32 %s75, 1
        %s233 = scalar_lea.sflag [#allocation4], %s232
        %s234 = sand.u32 %s75, 1
        %s235 = smul.addr %s234, 8
        %s236 = scalar_lea.vmem [#allocation7], %s235
        // Predicated region
        $region37: #{tpu_custom_call.1} parent=27 // pred_check
          %p237 = pneg %p85
        $region38: #{tpu_custom_call.1} parent=27 // pred_check_branch
          %239 = sbr.rel (%p237) target = $region40
        $region39: #{tpu_custom_call.1} parent=27 // pred_region
          %s241 = ssub.s32 128, 128
          %242 = vsyncadd %s233, %s241
          %s243 = smul.addr %s20, 2
          %s244 = smul.addr %s243, 64
          %s245 = scalar_lea.hbm %s2, %s244
          %s247 = sshll.u32 %s236, 4
          %s248 = int_to_ptr.vmem [resolvable:$true] %s247
          %250 = dma.vmem_to_hbm [thread:$0]  %s248, 128, %s245, %s233
        $region40: #{tpu_custom_call.1} parent=27 // pred_fallthru
          _
      $region28: #{tpu_custom_call.1} parent=5 // pred_fallthru
        _
      %p251 = scmp.le.s32.totalorder 2, %s15
      // Predicated region
      $region41: #{tpu_custom_call.1} parent=5 // pred_check
        %p252 = pneg %p251
      $region42: #{tpu_custom_call.1} parent=5 // pred_check_branch
        %254 = sbr.rel (%p252) target = $region44
      $region43: #{tpu_custom_call.1} parent=5 // pred_region
        %s255 = ssub.s32 %s15, 2
        // Predicated region
        $region45: #{tpu_custom_call.1} parent=43 // pred_check
          %p256 = pneg %p91
        $region46: #{tpu_custom_call.1} parent=43 // pred_check_branch
          %258 = sbr.rel (%p256) target = $region48
        $region47: #{tpu_custom_call.1} parent=43 // pred_region
          %s259 = sand.u32 %s76, 1
          %s260 = scalar_lea.sflag [#allocation4], %s259
          %s261 = sand.u32 %s76, 1
          %s262 = smul.addr %s261, 8
          %s263 = scalar_lea.vmem [#allocation7], %s262
          %264 = dma.done %s260, 128
        $region48: #{tpu_custom_call.1} parent=43 // pred_fallthru
          _
      $region44: #{tpu_custom_call.1} parent=5 // pred_fallthru
        _
    $region6: #{tpu_custom_call.1} parent=1 // loop_footer
      %s19 = sadd.s32 1, %s15
    $region7: #{tpu_custom_call.1} parent=1 // loop_footer_branch
      %14 = sbr.rel target = $region3
    $region8: #{tpu_custom_call.1} parent=1 // loop_exit
      _
    %265 = vsyncpa [#allocation3], 1
    %s266 = scalar_lea.sflag [#allocation3], 1
    %267 = vsyncpa %s266, 1
    %268 = vsyncpa [#allocation6], 1
    %269 = vsyncpa [#allocation4], 1
    %s270 = scalar_lea.sflag [#allocation4], 1
    %271 = vsyncpa %s270, 1

</llo_original>
